<compile_context>
chip_gen: v7x
topology: tpu7x:2x2x1
jax: 0.10.0
libtpu: 0.0.40
codegen_flags: <defaults>
</compile_context>

<pallas_src>
import functools

import jax
import jax.numpy as jnp
from jax import lax
from jax.experimental import pallas as pl
from jax.experimental.pallas import tpu as pltpu


def _kd_kernel(x_ref, t_ref, out_ref, *, inv_temp: float, n_valid: int,
               tile_n: int):
    """One (TN, C) tile: fused softmax/KL, per-row KL written to out block."""
    i = pl.program_id(0)

    # Native-dtype tiles from HBM, cast to f32 in VMEM; apply 1/T.
    x = x_ref[...].astype(jnp.float32) * inv_temp   # student logits / T
    t = t_ref[...].astype(jnp.float32) * inv_temp   # teacher logits / T

    # Numerically-stable shifted logits.
    sx = x - jnp.max(x, axis=-1, keepdims=True)      # (TN, C)
    st = t - jnp.max(t, axis=-1, keepdims=True)      # (TN, C)

    lse_x = jnp.log(jnp.sum(jnp.exp(sx), axis=-1, keepdims=True))  # (TN, 1)
    et = jnp.exp(st)                                               # (TN, C)
    z_t = jnp.sum(et, axis=-1, keepdims=True)                      # (TN, 1)

    # Fused per-row KL(q || p):
    #   sum_c q_c * (log q_c - log p_c)
    # = (1/Z_t) * sum_c e^{st_c} * (st_c - sx_c) + lse_x - log Z_t
    weighted = jnp.sum(et * (st - sx), axis=-1, keepdims=True)     # (TN, 1)
    row_kl = weighted / z_t + lse_x - jnp.log(z_t)                 # (TN, 1)

    is_last = i == pl.num_programs(0) - 1

    @pl.when(jnp.logical_not(is_last))
    def _full_tile():
        out_ref[...] = row_kl

    @pl.when(is_last)
    def _partial_tile():
        # Rows past the true batch size contain undefined data (partial block):
        # mask them (exp() of garbage may be inf/NaN; the select removes it).
        row_idx = i * tile_n + lax.broadcasted_iota(jnp.int32, row_kl.shape, 0)
        out_ref[...] = jnp.where(row_idx < n_valid, row_kl, 0.0)


def _round_up(v: int, m: int) -> int:
    return ((v + m - 1) // m) * m


def _vmem_limit_bytes() -> int:
    """Scoped-VMEM limit derived from chip capacity (48 MiB fallback)."""
    cap = 64 * 1024 * 1024
    try:
        info = pltpu.get_tpu_info()
        cap = int(getattr(info, "vmem_capacity_bytes", cap))
    except Exception:
        pass
    return min(96 * 1024 * 1024, (cap * 3) // 4)


def kd_loss(student_logits, teacher_logits, temp_factor, *,
            max_tile_rows: int = 1024):
    """student_logits, teacher_logits: (N, C) floats -> scalar f32 KD loss."""
    n, c = student_logits.shape
    assert teacher_logits.shape == (n, c)

    vmem_limit = _vmem_limit_bytes()

    # Packed-sublane multiple for the native input dtype (8/f32, 16/bf16, 32/i8).
    sub = max(8,
              32 // student_logits.dtype.itemsize,
              32 // teacher_logits.dtype.itemsize)

    # Tile rows from a total-footprint budget:
    #   2 inputs x 2 DMA buffers x (TN*C*itemsize) + ~5 live f32 (TN,C) slabs.
    # Target one f32 slab at ~vmem_limit/12 (>= 2 MiB), which keeps the total
    # comfortably inside the scoped limit on 64 MiB (v7x) and 128 MiB parts.
    f32_slab_bytes = max(2 * 1024 * 1024, vmem_limit // 12)
    budget_rows = max(sub, f32_slab_bytes // max(1, c * 4))
    tn = min(max_tile_rows, budget_rows, _round_up(n, sub))
    tn = max(sub, (tn // sub) * sub)

    n_tiles = pl.cdiv(n, tn)           # no jnp.pad: partial last block, masked

    kernel = functools.partial(
        _kd_kernel,
        inv_temp=1.0 / float(temp_factor),
        n_valid=n,
        tile_n=tn,
    )

    bytes_accessed = (n * c * (student_logits.dtype.itemsize
                               + teacher_logits.dtype.itemsize)
                      + n_tiles * tn * 4)
    cost = pl.CostEstimate(
        flops=12 * n * c,
        transcendentals=2 * n * c,
        bytes_accessed=bytes_accessed,
    )

    partials = pl.pallas_call(
        kernel,
        out_shape=jax.ShapeDtypeStruct((n_tiles * tn, 1), jnp.float32),
        grid=(n_tiles,),
        in_specs=[
            pl.BlockSpec((tn, c), lambda i: (i, 0)),
            pl.BlockSpec((tn, c), lambda i: (i, 0)),
        ],
        out_specs=pl.BlockSpec((tn, 1), lambda i: (i, 0)),
        compiler_params=pltpu.CompilerParams(
            dimension_semantics=("parallel",),   # no carried state -> megacore
            vmem_limit_bytes=vmem_limit,
        ),
        cost_estimate=cost,
    )(student_logits, teacher_logits)

    # Tiny final reduction + T^2 / N scaling outside the kernel.
    return jnp.sum(partials) * (float(temp_factor) ** 2 / float(n))


def _reference(student_logits, teacher_logits, temp_factor):
    x = student_logits.astype(jnp.float32) / temp_factor
    t = teacher_logits.astype(jnp.float32) / temp_factor
    log_p = jax.nn.log_softmax(x, axis=1)
    log_q = jax.nn.log_softmax(t, axis=1)
    q = jnp.exp(log_q)
    kl = jnp.sum(q * (log_q - log_p))
    return kl * temp_factor ** 2 / student_logits.shape[0]


if __name__ == "__main__":
    key = jax.random.PRNGKey(0)
    k1, k2, k3, k4 = jax.random.split(key, 4)
    T = 4.0

    # Case 1: small aligned shape, f32 logits, single tile.
    n, c = 8, 32
    x = jax.random.normal(k1, (n, c), dtype=jnp.float32)
    t = jax.random.normal(k2, (n, c), dtype=jnp.float32)
    got = jax.block_until_ready(kd_loss(x, t, T))
    ref = _reference(x, t, T)
    assert jnp.allclose(got, ref, atol=1e-5, rtol=1e-5), (got, ref)

    # Case 2: unaligned batch -> multi-tile grid + partial last block masking.
    n2, c2 = 13, 40
    x2 = jax.random.normal(k3, (n2, c2), dtype=jnp.float32)
    t2 = jax.random.normal(k4, (n2, c2), dtype=jnp.float32)
    got2 = jax.block_until_ready(kd_loss(x2, t2, T, max_tile_rows=8))
    ref2 = _reference(x2, t2, T)
    assert jnp.allclose(got2, ref2, atol=1e-5, rtol=1e-5), (got2, ref2)

    # Case 3: bf16 logits in HBM (native-dtype DMA, 16-row sublane tiles,
    # f32 compute in-kernel).
    xb = x.astype(jnp.bfloat16)
    tb = t.astype(jnp.bfloat16)
    got3 = jax.block_until_ready(kd_loss(xb, tb, T))
    ref3 = _reference(xb, tb, T)
    assert jnp.allclose(got3, ref3, atol=1e-4, rtol=1e-4), (got3, ref3)

    print("KERNEL_OK")
</pallas_src>

<mosaic_0001>
module attributes {stable_mosaic.version = 11 : i64} {
  func.func @_kd_kernel(%arg0: i32, %arg1: memref<8x32xf32, #tpu.memory_space<vmem>>, %arg2: memref<8x32xf32, #tpu.memory_space<vmem>>, %arg3: memref<8x1xf32, #tpu.memory_space<vmem>>) attributes {dimension_semantics = [#tpu.dimension_semantics<parallel>], iteration_bounds = array<i64: 1>, scalar_prefetch = 0 : i64, scratch_operands = 0 : i64, tpu.core_type = #tpu.core_type<tc>, window_params = [{transform_indices = @transform_0, window_bounds = array<i64: 8, 32>}, {transform_indices = @transform_1, window_bounds = array<i64: 8, 32>}, {transform_indices = @transform_2, window_bounds = array<i64: 8, 1>}]} {
    %c0 = arith.constant 0 : index
    %c0_0 = arith.constant 0 : index
    %0 = vector.load %arg1[%c0, %c0_0] : memref<8x32xf32, #tpu.memory_space<vmem>>, vector<8x32xf32>
    %cst = arith.constant 2.500000e-01 : f32
    %1 = vector.broadcast %cst : f32 to vector<8x32xf32>
    %2 = arith.mulf %0, %1 : vector<8x32xf32>
    %c0_1 = arith.constant 0 : index
    %c0_2 = arith.constant 0 : index
    %3 = vector.load %arg2[%c0_1, %c0_2] : memref<8x32xf32, #tpu.memory_space<vmem>>, vector<8x32xf32>
    %cst_3 = arith.constant 2.500000e-01 : f32
    %4 = vector.broadcast %cst_3 : f32 to vector<8x32xf32>
    %5 = arith.mulf %3, %4 : vector<8x32xf32>
    %cst_4 = arith.constant dense<0xFF800000> : vector<8xf32>
    %6 = vector.multi_reduction <maximumf>, %2, %cst_4 [1] : vector<8x32xf32> to vector<8xf32>
    %7 = vector.shape_cast %6 : vector<8xf32> to vector<8x1xf32>
    %8 = vector.broadcast %7 : vector<8x1xf32> to vector<8x32xf32>
    %9 = arith.subf %2, %8 : vector<8x32xf32>
    %cst_5 = arith.constant dense<0xFF800000> : vector<8xf32>
    %10 = vector.multi_reduction <maximumf>, %5, %cst_5 [1] : vector<8x32xf32> to vector<8xf32>
    %11 = vector.shape_cast %10 : vector<8xf32> to vector<8x1xf32>
    %12 = vector.broadcast %11 : vector<8x1xf32> to vector<8x32xf32>
    %13 = arith.subf %5, %12 : vector<8x32xf32>
    %14 = math.exp %9 : vector<8x32xf32>
    %cst_6 = arith.constant dense<0.000000e+00> : vector<8xf32>
    %15 = vector.multi_reduction <add>, %14, %cst_6 [1] : vector<8x32xf32> to vector<8xf32>
    %16 = vector.shape_cast %15 : vector<8xf32> to vector<8x1xf32>
    %17 = math.log %16 : vector<8x1xf32>
    %18 = math.exp %13 : vector<8x32xf32>
    %cst_7 = arith.constant dense<0.000000e+00> : vector<8xf32>
    %19 = vector.multi_reduction <add>, %18, %cst_7 [1] : vector<8x32xf32> to vector<8xf32>
    %20 = vector.shape_cast %19 : vector<8xf32> to vector<8x1xf32>
    %21 = arith.subf %13, %9 : vector<8x32xf32>
    %22 = arith.mulf %18, %21 : vector<8x32xf32>
    %cst_8 = arith.constant dense<0.000000e+00> : vector<8xf32>
    %23 = vector.multi_reduction <add>, %22, %cst_8 [1] : vector<8x32xf32> to vector<8xf32>
    %24 = vector.shape_cast %23 : vector<8xf32> to vector<8x1xf32>
    %25 = arith.divf %24, %20 : vector<8x1xf32>
    %26 = arith.addf %25, %17 : vector<8x1xf32>
    %27 = math.log %20 : vector<8x1xf32>
    %28 = arith.subf %26, %27 : vector<8x1xf32>
    %c0_i32 = arith.constant 0 : i32
    %29 = arith.cmpi eq, %arg0, %c0_i32 : i32
    %true = arith.constant true
    %30 = arith.xori %29, %true : i1
    %31 = arith.extui %30 : i1 to i32
    %c0_i32_9 = arith.constant 0 : i32
    %32 = arith.cmpi ne, %31, %c0_i32_9 : i32
    scf.if %32 {
      %c0_11 = arith.constant 0 : index
      %c0_12 = arith.constant 0 : index
      %35 = vector.load %arg3[%c0_11, %c0_12] : memref<8x1xf32, #tpu.memory_space<vmem>>, vector<8x1xf32>
      tpu.vector_store %arg3[%c0_11, %c0_12], %28 {strides = array<i32>} : memref<8x1xf32, #tpu.memory_space<vmem>>, vector<8x1xf32>,
    } else {
    }
    %33 = arith.extui %29 : i1 to i32
    %c0_i32_10 = arith.constant 0 : i32
    %34 = arith.cmpi ne, %33, %c0_i32_10 : i32
    scf.if %34 {
      %c8_i32 = arith.constant 8 : i32
      %35 = arith.muli %arg0, %c8_i32 : i32
      %36 = tpu.iota {dimensions = array<i32: 0>} : vector<8x1xi32>
      %37 = vector.broadcast %35 : i32 to vector<8x1xi32>
      %38 = arith.addi %37, %36 : vector<8x1xi32>
      %c8_i32_11 = arith.constant 8 : i32
      %39 = vector.broadcast %c8_i32_11 : i32 to vector<8x1xi32>
      %40 = arith.cmpi slt, %38, %39 : vector<8x1xi32>
      %cst_12 = arith.constant 0.000000e+00 : f32
      %41 = vector.broadcast %cst_12 : f32 to vector<8x1xf32>
      %42 = arith.select %40, %28, %41 : vector<8x1xi1>, vector<8x1xf32>
      %c0_13 = arith.constant 0 : index
      %c0_14 = arith.constant 0 : index
      %43 = vector.load %arg3[%c0_13, %c0_14] : memref<8x1xf32, #tpu.memory_space<vmem>>, vector<8x1xf32>
      tpu.vector_store %arg3[%c0_13, %c0_14], %42 {strides = array<i32>} : memref<8x1xf32, #tpu.memory_space<vmem>>, vector<8x1xf32>,
    } else {
    }
    return
  }
  func.func @transform_0(%arg0: i32) -> (i32, i32) {
    %c0_i32 = arith.constant 0 : i32
    %c0_i32_0 = arith.constant 0 : i32
    return %arg0, %c0_i32 : i32, i32
  }
  func.func @transform_1(%arg0: i32) -> (i32, i32) {
    %c0_i32 = arith.constant 0 : i32
    %c0_i32_0 = arith.constant 0 : i32
    return %arg0, %c0_i32 : i32, i32
  }
  func.func @transform_2(%arg0: i32) -> (i32, i32) {
    %c0_i32 = arith.constant 0 : i32
    %c0_i32_0 = arith.constant 0 : i32
    return %arg0, %c0_i32 : i32, i32
  }
}

</mosaic_0001>

<llo_original>
// kernel: tpu_custom_call.1
$region0: #{tpu_custom_call.1}
  #allocation0 [shape = 'u32[]', space=smem, size = 0x4, offset = 0x4, fixed_abs, tag = 'smem constant byte address 0x4 - core index']
  #allocation1 [shape = 'u32[144,128]{1,0:T(1,128)}', space=vmem, size = 0x12000, scoped, tag = 'internal scratch']
  %s0 = inlined_call_operand.hbm [shape: f32[8,32], index: 0, kind: input, shape index: {}]
  %s1 = inlined_call_operand.hbm [shape: f32[8,32], index: 1, kind: input, shape index: {}]
  %s2 = inlined_call_operand.vmem [shape: f32[8,1], index: 2, kind: output, shape index: {}]
  %s3 = sld [smem:[#allocation0]]
  $region34: #{tpu_custom_call.1} parent=0
    _
  %s5 = ssub.s32 1, %s3
  %s6 = scalar_select 0, %s5, %s3
  $region1: #{tpu_custom_call.1} parent=0
    #allocation2 [shape = 'u8[4096]{0}', space=vmem, size = 0x1000, scoped, tag = 'input window, operand 0, single buffered']
    #allocation3 [shape = 's32[1]{0}', space=sflag, size = 0x4, scoped, tag = 'scoped memory for tpu_custom_call.1']
    #allocation4 [shape = 'u8[4096]{0}', space=vmem, size = 0x1000, scoped, tag = 'input window, operand 1, single buffered']
    #allocation5 [shape = 's32[1]{0}', space=sflag, size = 0x4, scoped, tag = 'scoped memory for tpu_custom_call.1']
    %7 = vsyncpa [#allocation3], 0
    %8 = vsyncpa [#allocation5], 0
    // Predicated region
    $region2: #{tpu_custom_call.1} parent=1 // pred_check
      _
    $region3: #{tpu_custom_call.1} parent=1 // pred_check_branch
      %10 = sbr.rel (0) target = $region5
    $region4: #{tpu_custom_call.1} parent=1 // pred_region
      %s12 = ssub.s32 128, 128
      %13 = vsyncadd [#allocation3], %s12
      %s15 = sshll.u32 [#allocation2], 4
      %s16 = int_to_ptr.vmem [resolvable:$true] %s15
      %18 = dma.hbm_to_vmem [thread:$0]  %s0, 128, %s16, [#allocation3]
    $region5: #{tpu_custom_call.1} parent=1 // pred_fallthru
      _
    // Predicated region
    $region6: #{tpu_custom_call.1} parent=1 // pred_check
      _
    $region7: #{tpu_custom_call.1} parent=1 // pred_check_branch
      %20 = sbr.rel (0) target = $region9
    $region8: #{tpu_custom_call.1} parent=1 // pred_region
      %s22 = ssub.s32 128, 128
      %23 = vsyncadd [#allocation5], %s22
      %s25 = sshll.u32 [#allocation4], 4
      %s26 = int_to_ptr.vmem [resolvable:$true] %s25
      %28 = dma.hbm_to_vmem [thread:$0]  %s1, 128, %s26, [#allocation5]
    $region9: #{tpu_custom_call.1} parent=1 // pred_fallthru
      _
    // Predicated region
    $region10: #{tpu_custom_call.1} parent=1 // pred_check
      _
    $region11: #{tpu_custom_call.1} parent=1 // pred_check_branch
      %30 = sbr.rel (0) target = $region13
    $region12: #{tpu_custom_call.1} parent=1 // pred_region
      %31 = dma.done [#allocation3], 128
    $region13: #{tpu_custom_call.1} parent=1 // pred_fallthru
      _
    // Predicated region
    $region14: #{tpu_custom_call.1} parent=1 // pred_check
      _
    $region15: #{tpu_custom_call.1} parent=1 // pred_check_branch
      %33 = sbr.rel (0) target = $region17
    $region16: #{tpu_custom_call.1} parent=1 // pred_region
      %34 = dma.done [#allocation5], 128
    $region17: #{tpu_custom_call.1} parent=1 // pred_fallthru
      _
    %v35 = vld [vmem:[#allocation2] sm:$0xff]
    %v36 = vmul.f32 %v35, 0.25
    %v37 = vld [vmem:[#allocation4] sm:$0xff]
    %v38 = vmul.f32 %v37, 0.25
    %vm39 = vcmask 261120
    %v40 = vsel %vm39, %v36, -inf
    %41 = vmax.xlane.f32.xlu0 %v40
    %v42 = vpop.xlane.xlu0 %41
    %v43 = vsub.f32 %v36, %v42
    %v44 = vsel %vm39, %v38, -inf
    %45 = vmax.xlane.f32.xlu0 %v44
    %v46 = vpop.xlane.xlu0 %45
    %v47 = vsub.f32 %v38, %v46
    %v48 = vmul.f32 %v43, 1.442695
    %v49 = vpow.pop %v48
    %v50 = vsel %vm39, %v49, 0.0
    %51 = vadd.xlane.f32.xlu0 %v50
    %v52 = vpop.xlane.xlu0 %51
    %v53 = vlog2.pop %v52
    %v54 = vmul.f32 %v53, 0.6931472
    %v55 = vmul.f32 %v47, 1.442695
    %v56 = vpow.pop %v55
    %v57 = vsel %vm39, %v56, 0.0
    %58 = vadd.xlane.f32.xlu0 %v57
    %v59 = vpop.xlane.xlu0 %58
    %v60 = vsub.f32 %v47, %v43
    %v61 = vmul.f32 %v56, %v60
    %v62 = vsel %vm39, %v61, 0.0
    %63 = vadd.xlane.f32.xlu0 %v62
    %v64 = vpop.xlane.xlu0 %63
    %v65 = vrcp.pop %v59
    %v66 = vmul.f32 %v64, %v65
    %v67 = vadd.f32 %v66, %v54
    %v68 = vlog2.pop %v59
    %v69 = vmul.f32 %v68, 0.6931472
    %v70 = vsub.f32 %v67, %v69
    %p71 = scmp.eq.s32.totalorder 0, 0
    %p72 = scmp.ne.s32.totalorder 0, 0
    // Predicated region
    $region18: #{tpu_custom_call.1} parent=1 // pred_check
      %p73 = pneg %p72
    $region19: #{tpu_custom_call.1} parent=1 // pred_check_branch
      %75 = sbr.rel (%p73) target = $region21
    $region20: #{tpu_custom_call.1} parent=1 // pred_region
      %vm76 = vcmask 7168
      %77 = vst.msk [vmem:[%s2] sm:$0xff] %vm76, %v70
    $region21: #{tpu_custom_call.1} parent=1 // pred_fallthru
      _
    // Predicated region
    $region22: #{tpu_custom_call.1} parent=1 // pred_check
      %p78 = pneg %p71
    $region23: #{tpu_custom_call.1} parent=1 // pred_check_branch
      %80 = sbr.rel (%p78) target = $region25
    $region24: #{tpu_custom_call.1} parent=1 // pred_region
      %s81 = smul.u32 0, 8
      %v82 = vlaneseq
      %v83 = vshrl.u32 %v82, 7
      %v84 = vstv %s81
      %v85 = vadd.s32 %v84, %v83
      %vm86 = vcmp.lt.s32.totalorder %v85, 8
      %v87 = vsel %vm86, %v70, 0.0
      %vm88 = vcmask 7168
      %89 = vst.msk [vmem:[%s2] sm:$0xff] %vm88, %v87
    $region25: #{tpu_custom_call.1} parent=1 // pred_fallthru
      _
    // Predicated region
    $region26: #{tpu_custom_call.1} parent=1 // pred_check
      _
    $region27: #{tpu_custom_call.1} parent=1 // pred_check_branch
      %91 = sbr.rel (0) target = $region29
    $region28: #{tpu_custom_call.1} parent=1 // pred_region
      _
    $region29: #{tpu_custom_call.1} parent=1 // pred_fallthru
      _
    // Predicated region
    $region30: #{tpu_custom_call.1} parent=1 // pred_check
      _
    $region31: #{tpu_custom_call.1} parent=1 // pred_check_branch
      %93 = sbr.rel (0) target = $region33
    $region32: #{tpu_custom_call.1} parent=1 // pred_region
      _
    $region33: #{tpu_custom_call.1} parent=1 // pred_fallthru
      _
    %94 = vsyncpa [#allocation3], 1
    %95 = vsyncpa [#allocation5], 1

</llo_original>
